<compile_context>
chip_gen: v7x
topology: tpu7x:2x2x1
jax: 0.10.0
libtpu: 0.0.40
codegen_flags: <defaults>
</compile_context>

<pallas_src>
import functools

import jax
import jax.numpy as jnp
from jax.experimental import pallas as pl
from jax.experimental.pallas import tpu as pltpu


def _round_up(x, m):
    return ((x + m - 1) // m) * m


# ----------------------------------------------------------------------------
# Pallas kernel: one (Cout, TM) output tile per grid step.
# ----------------------------------------------------------------------------
def _fuse_kernel(d_ref, w_ref, bias_ref, o_ref, *, negative_slope):
    # d_ref:    (1, K, TM)     im2col'd (x1 - x2) patches, patch index in lanes
    # w_ref:    (Cout, K)      conv weight (block-invariant, resident)
    # bias_ref: (Cout, 1)      conv bias   (block-invariant, resident)
    # o_ref:    (1, Cout, TM)  lane-dense output tile
    d = d_ref[0]                                                       # (K, TM)
    y = jnp.dot(w_ref[...], d, preferred_element_type=jnp.float32)    # MXU, f32 acc
    y = y + bias_ref[...]                                              # broadcast over lanes
    y = jnp.maximum(y, negative_slope * y)                             # LeakyReLU (0<slope<1)
    o_ref[0] = y.astype(o_ref.dtype)


# ----------------------------------------------------------------------------
# Glue: non-overlapping patch extraction with the patch index LAST (lanes).
# ----------------------------------------------------------------------------
def _diff_to_patches(diff, patch_size):
    """(B, Cin, D, H, W) -> (B, Cin*pd*ph*pw, Do*Ho*Wo); K ordered (Cin,pd,ph,pw)."""
    B, Cin, D, H, W = diff.shape
    pd, ph, pw = patch_size
    Do, Ho, Wo = D // pd, H // ph, W // pw
    x = diff.reshape(B, Cin, Do, pd, Ho, ph, Wo, pw)
    x = jnp.transpose(x, (0, 1, 3, 5, 7, 2, 4, 6))  # (B, Cin, pd, ph, pw, Do, Ho, Wo)
    return x.reshape(B, Cin * pd * ph * pw, Do * Ho * Wo)


def _pick_tile(S, tile_m):
    """Largest multiple of 128 <= tile_m that divides the 128-aligned spatial extent."""
    S_pad = _round_up(S, 128)
    tm = max(128, min(_round_up(tile_m, 128), S_pad))
    tm = (tm // 128) * 128
    while S_pad % tm != 0:
        tm -= 128
    return tm, S_pad


# ----------------------------------------------------------------------------
# Wrapper: tiling, BlockSpecs, pallas_call, output reshape (no transpose).
# ----------------------------------------------------------------------------
def fuse_forward(x1, x2, weight, bias, patch_size, negative_slope=0.01,
                 tile_m=1024, use_bf16=False):
    B, Cin, D, H, W = x1.shape
    pd, ph, pw = patch_size
    assert D % pd == 0 and H % ph == 0 and W % pw == 0, "spatial dims must divide patch_size"
    Do, Ho, Wo = D // pd, H // ph, W // pw
    Cout = weight.shape[0]
    K = Cin * pd * ph * pw
    S = Do * Ho * Wo

    # Pre-subtract: XLA fuses the subtract into the single im2col relayout,
    # and the kernel streams one patch matrix instead of two.
    diff = x1 - x2
    dp = _diff_to_patches(diff, patch_size)                 # (B, K, S)

    TM, S_pad = _pick_tile(S, tile_m)
    if S_pad != S:
        # Ragged spatial extent: pad lanes (sliced off below). At typical
        # shapes S % 128 == 0 and this branch never materializes a copy.
        dp = jnp.pad(dp, ((0, 0), (0, 0), (0, S_pad - S)))

    compute_dtype = jnp.bfloat16 if use_bf16 else jnp.float32
    dp = dp.astype(compute_dtype)
    wmat = weight.reshape(Cout, K).astype(compute_dtype)    # (Cout, K)
    bvec = bias.reshape(Cout, 1).astype(jnp.float32)        # (Cout, 1)

    kernel = functools.partial(_fuse_kernel, negative_slope=negative_slope)

    grid_spec = pltpu.PrefetchScalarGridSpec(
        num_scalar_prefetch=0,
        grid=(B, S_pad // TM),
        in_specs=[
            pl.BlockSpec((1, K, TM), lambda b, m: (b, 0, m)),     # diff patches (streamed)
            pl.BlockSpec((Cout, K), lambda b, m: (0, 0)),         # weight (resident)
            pl.BlockSpec((Cout, 1), lambda b, m: (0, 0)),         # bias   (resident)
        ],
        out_specs=pl.BlockSpec((1, Cout, TM), lambda b, m: (b, 0, m)),
    )

    out = pl.pallas_call(
        kernel,
        out_shape=jax.ShapeDtypeStruct((B, Cout, S_pad), x1.dtype),
        grid_spec=grid_spec,
        compiler_params=pltpu.CompilerParams(
            dimension_semantics=("parallel", "parallel")),
    )(dp, wmat, bvec)

    if S_pad != S:
        out = out[:, :, :S]
    # Output is already (B, Cout, spatial) -> pure reshape, no relayout.
    return out.reshape(B, Cout, Do, Ho, Wo)


# ----------------------------------------------------------------------------
# Pure-JAX reference (mirrors the PyTorch forward) for correctness checking
# ----------------------------------------------------------------------------
def reference_forward(x1, x2, weight, bias, patch_size, negative_slope=0.01):
    y = jax.lax.conv_general_dilated(
        x1 - x2, weight, window_strides=patch_size, padding="VALID",
        dimension_numbers=("NCDHW", "OIDHW", "NCDHW"))
    y = y + bias.reshape(1, -1, 1, 1, 1)
    return jnp.where(y >= 0.0, y, negative_slope * y)


if __name__ == "__main__":
    # Small shapes consistent with the module: (B, Cin, D, H, W), patch_size=(2,1,1)
    B, Cin, D, H, W = 2, 8, 8, 16, 16
    patch_size = (2, 1, 1)
    Cout = 64

    key = jax.random.PRNGKey(0)
    k1, k2, k3, k4 = jax.random.split(key, 4)
    x1 = jax.random.normal(k1, (B, Cin, D, H, W), jnp.float32)
    x2 = jax.random.normal(k2, (B, Cin, D, H, W), jnp.float32)
    weight = 0.1 * jax.random.normal(k3, (Cout, Cin) + patch_size, jnp.float32)  # Conv3d (O,I,kD,kH,kW)
    bias = 0.1 * jax.random.normal(k4, (Cout,), jnp.float32)

    out = fuse_forward(x1, x2, weight, bias, patch_size)
    out = jax.block_until_ready(out)

    ref = reference_forward(x1, x2, weight, bias, patch_size)
    assert out.shape == (B, Cout, D // patch_size[0], H // patch_size[1], W // patch_size[2]), out.shape
    err = jnp.max(jnp.abs(out - ref))
    assert jnp.allclose(out, ref, atol=1e-4, rtol=1e-4), f"max abs err {err}"

    print("KERNEL_OK")
</pallas_src>

<mosaic_0001>
module attributes {stable_mosaic.version = 11 : i64} {
  func.func @_fuse_kernel(%arg0: i32, %arg1: i32, %arg2: memref<1x16x1024xf32, #tpu.memory_space<vmem>>, %arg3: memref<64x16xf32, #tpu.memory_space<vmem>>, %arg4: memref<64x1xf32, #tpu.memory_space<vmem>>, %arg5: memref<1x64x1024xf32, #tpu.memory_space<vmem>>) attributes {dimension_semantics = [#tpu.dimension_semantics<parallel>, #tpu.dimension_semantics<parallel>], iteration_bounds = array<i64: 2, 1>, scalar_prefetch = 0 : i64, scratch_operands = 0 : i64, tpu.core_type = #tpu.core_type<tc>, window_params = [{transform_indices = @transform_0, window_bounds = array<i64: 1, 16, 1024>}, {pipeline_mode = #tpu.pipeline_mode<synchronous>, transform_indices = @transform_1, window_bounds = array<i64: 64, 16>}, {pipeline_mode = #tpu.pipeline_mode<synchronous>, transform_indices = @transform_2, window_bounds = array<i64: 64, 1>}, {transform_indices = @transform_3, window_bounds = array<i64: 1, 64, 1024>}]} {
    %c0 = arith.constant 0 : index
    %c0_0 = arith.constant 0 : index
    %c0_1 = arith.constant 0 : index
    %0 = vector.load %arg2[%c0, %c0_0, %c0_1] : memref<1x16x1024xf32, #tpu.memory_space<vmem>>, vector<1x16x1024xf32>
    %1 = vector.shape_cast %0 : vector<1x16x1024xf32> to vector<16x1024xf32>
    %c0_2 = arith.constant 0 : index
    %c0_3 = arith.constant 0 : index
    %2 = vector.load %arg3[%c0_2, %c0_3] : memref<64x16xf32, #tpu.memory_space<vmem>>, vector<64x16xf32>
    %cst = arith.constant dense<0.000000e+00> : vector<64x1024xf32>
    %3 = tpu.matmul %2, %1, %cst {dimension_numbers = #tpu.dot_dimension_numbers<[1], [0], [0], [1], [0, 0, 1, 1], [], []>} : vector<64x16xf32>, vector<16x1024xf32>, vector<64x1024xf32> -> vector<64x1024xf32>
    %c0_4 = arith.constant 0 : index
    %c0_5 = arith.constant 0 : index
    %4 = vector.load %arg4[%c0_4, %c0_5] : memref<64x1xf32, #tpu.memory_space<vmem>>, vector<64x1xf32>
    %5 = vector.broadcast %4 : vector<64x1xf32> to vector<64x1024xf32>
    %6 = arith.addf %3, %5 : vector<64x1024xf32>
    %cst_6 = arith.constant 0.00999999977 : f32
    %7 = vector.broadcast %cst_6 : f32 to vector<64x1024xf32>
    %8 = arith.mulf %7, %6 : vector<64x1024xf32>
    %9 = arith.maximumf %6, %8 : vector<64x1024xf32>
    %c0_7 = arith.constant 0 : index
    %c0_8 = arith.constant 0 : index
    %c0_9 = arith.constant 0 : index
    %10 = vector.load %arg5[%c0_7, %c0_8, %c0_9] : memref<1x64x1024xf32, #tpu.memory_space<vmem>>, vector<1x64x1024xf32>
    %11 = vector.shape_cast %10 : vector<1x64x1024xf32> to vector<64x1024xf32>
    %12 = vector.shape_cast %9 : vector<64x1024xf32> to vector<1x64x1024xf32>
    tpu.vector_store %arg5[%c0_7, %c0_8, %c0_9], %12 {strides = array<i32>} : memref<1x64x1024xf32, #tpu.memory_space<vmem>>, vector<1x64x1024xf32>,
    return
  }
  func.func @transform_0(%arg0: i32, %arg1: i32) -> (i32, i32, i32) {
    %c0_i32 = arith.constant 0 : i32
    %c0_i32_0 = arith.constant 0 : i32
    return %arg0, %c0_i32, %arg1 : i32, i32, i32
  }
  func.func @transform_1(%arg0: i32, %arg1: i32) -> (i32, i32) {
    %c0_i32 = arith.constant 0 : i32
    %c0_i32_0 = arith.constant 0 : i32
    %c0_i32_1 = arith.constant 0 : i32
    return %c0_i32, %c0_i32_0 : i32, i32
  }
  func.func @transform_2(%arg0: i32, %arg1: i32) -> (i32, i32) {
    %c0_i32 = arith.constant 0 : i32
    %c0_i32_0 = arith.constant 0 : i32
    %c0_i32_1 = arith.constant 0 : i32
    return %c0_i32, %c0_i32_0 : i32, i32
  }
  func.func @transform_3(%arg0: i32, %arg1: i32) -> (i32, i32, i32) {
    %c0_i32 = arith.constant 0 : i32
    %c0_i32_0 = arith.constant 0 : i32
    return %arg0, %c0_i32, %arg1 : i32, i32, i32
  }
}

</mosaic_0001>

<llo_original>
// kernel: tpu_custom_call.1
$region0: #{tpu_custom_call.1}
  #allocation0 [shape = 'u32[]', space=smem, size = 0x4, offset = 0x4, fixed_abs, tag = 'smem constant byte address 0x4 - core index']
  #allocation1 [shape = 'u32[144,128]{1,0:T(1,128)}', space=vmem, size = 0x12000, scoped, tag = 'internal scratch']
  %s0 = inlined_call_operand.hbm [shape: f32[2,16,1024], index: 0, kind: input, shape index: {}]
  %s1 = inlined_call_operand.vmem [shape: f32[64,16], index: 1, kind: input, shape index: {}]
  %s2 = inlined_call_operand.vmem [shape: f32[64,1], index: 2, kind: input, shape index: {}]
  %s3 = inlined_call_operand.hbm [shape: f32[2,64,1024], index: 3, kind: output, shape index: {}]
  %s4 = sld [smem:[#allocation0]]
  $region49: #{tpu_custom_call.1} parent=0
    _
  %s6 = ssub.s32 1, %s4
  %s7 = scalar_select 0, %s6, %s4
  $region1: #{tpu_custom_call.1} parent=0
    #allocation2 [shape = 'u8[131072]{0}', space=vmem, size = 0x20000, scoped, tag = 'input window, operand 0']
    #allocation3 [shape = 's32[2]{0}', space=sflag, size = 0x8, scoped, tag = 'scoped memory for tpu_custom_call.1']
    #allocation4 [shape = 's32[2]{0}', space=sflag, size = 0x8, scoped, tag = 'scoped memory for tpu_custom_call.1']
    #allocation5 [shape = 'u8[524288]{0}', space=vmem, size = 0x80000, scoped, tag = 'output window, operand 0']
    %8 = vsyncpa [#allocation3], 0
    %s9 = scalar_lea.sflag [#allocation3], 1
    %10 = vsyncpa %s9, 0
    %11 = vsyncpa [#allocation4], 0
    %s12 = scalar_lea.sflag [#allocation4], 1
    %13 = vsyncpa %s12, 0
    loop: start=0, step=1, limit=4
    $region2: #{tpu_custom_call.1} parent=1 // loop_pre_header
      _
    $region3: #{tpu_custom_call.1} parent=1 // loop_header
      %s15 = sphi 0, %s19
      %p16 = scmp.ge.s32.totalorder %s15, 4
      %s22 = sphi 0, %s34
      %s23 = sphi 0, %s30
      %s24 = sphi 0, %s22
      %s25 = sphi 0, %s23
      %s26 = sphi 0, %s24
      %s27 = sphi 0, %s25
      %s39 = sphi 0, %s41
      %s42 = sphi 0, %s39
      %s43 = sphi 0, %s42
      %s59 = sphi 0, %s43
      %s63 = sphi 0, %s63
      %s65 = sphi 0, %s63
      %s66 = sphi 0, %s65
      %s80 = sphi 0, %s66
      %s84 = sphi 0, %s84
      %s86 = sphi 0, %s84
      %s87 = sphi 0, %s86
      %s101 = sphi 0, %s87
      %s109 = sphi 0, %s111
      %s112 = sphi 0, %s109
      %s113 = sphi 0, %s112
      %s129 = sphi 0, %s113
    $region4: #{tpu_custom_call.1} parent=1 // loop_header_branch
      %18 = sbr.rel (%p16) target = $region8
    $region5: #{tpu_custom_call.1} parent=1 // loop_body
      %s20 = ssub.s32 %s15, 1
      %s21 = ssub.s32 %s15, 2
      %s28 = sadd.s32 1, %s23
      %p29 = scmp.ge.s32.totalorder %s28, 1
      %s30 = scalar_select %p29, 0, %s28
      %s31 = sadd.s32 1, %s22
      %s32 = scalar_select %p29, %s31, %s22
      %p33 = scmp.ge.s32.totalorder %s32, 2
      %s34 = scalar_select %p33, 0, %s32
      %s35 = ssub.s32 %s22, %s34
      %s36 = ssub.s32 %s23, %s30
      %s37 = sor.u32 %s35, %s36
      %p38 = scmp.eq.s32.totalorder %s37, 0
      %s40 = sadd.s32 %s39, 1
      %s41 = scalar_select %p38, %s39, %s40
      %p44 = pneg %p38
      %p45 = scmp.eq.s32.totalorder %s15, 1
      %p46 = por %p44, %p45
      %p47 = scmp.ne.s32.totalorder %s39, %s42
      %p48 = scmp.eq.s32.totalorder %s15, 0
      %p49 = por %p47, %p48
      %p50 = scmp.ne.s32.totalorder %s39, %s42
      %p51 = scmp.eq.s32.totalorder %s20, 1
      %p52 = por %p50, %p51
      %p53 = scmp.ne.s32.totalorder %s42, %s43
      %p54 = scmp.eq.s32.totalorder %s20, 0
      %p55 = por %p53, %p54
      %p56 = scmp.ne.s32.totalorder %s42, %s43
      %p57 = scmp.eq.s32.totalorder %s21, 1
      %p58 = por %p56, %p57
      %p60 = scmp.ne.s32.totalorder %s43, %s59
      %p61 = scmp.eq.s32.totalorder %s21, 0
      %p62 = por %p60, %p61
      %s64 = sadd.s32 %s63, 1
      %p67 = scmp.eq.s32.totalorder %s15, 1
      %p68 = scmp.ne.s32.totalorder %s63, %s65
      %p69 = scmp.eq.s32.totalorder %s15, 0
      %p70 = por %p68, %p69
      %p71 = scmp.ne.s32.totalorder %s63, %s65
      %p72 = scmp.eq.s32.totalorder %s20, 1
      %p73 = por %p71, %p72
      %p74 = scmp.ne.s32.totalorder %s65, %s66
      %p75 = scmp.eq.s32.totalorder %s20, 0
      %p76 = por %p74, %p75
      %p77 = scmp.ne.s32.totalorder %s65, %s66
      %p78 = scmp.eq.s32.totalorder %s21, 1
      %p79 = por %p77, %p78
      %p81 = scmp.ne.s32.totalorder %s66, %s80
      %p82 = scmp.eq.s32.totalorder %s21, 0
      %p83 = por %p81, %p82
      %s85 = sadd.s32 %s84, 1
      %p88 = scmp.eq.s32.totalorder %s15, 1
      %p89 = scmp.ne.s32.totalorder %s84, %s86
      %p90 = scmp.eq.s32.totalorder %s15, 0
      %p91 = por %p89, %p90
      %p92 = scmp.ne.s32.totalorder %s84, %s86
      %p93 = scmp.eq.s32.totalorder %s20, 1
      %p94 = por %p92, %p93
      %p95 = scmp.ne.s32.totalorder %s86, %s87
      %p96 = scmp.eq.s32.totalorder %s20, 0
      %p97 = por %p95, %p96
      %p98 = scmp.ne.s32.totalorder %s86, %s87
      %p99 = scmp.eq.s32.totalorder %s21, 1
      %p100 = por %p98, %p99
      %p102 = scmp.ne.s32.totalorder %s87, %s101
      %p103 = scmp.eq.s32.totalorder %s21, 0
      %p104 = por %p102, %p103
      %s105 = ssub.s32 %s22, %s34
      %s106 = ssub.s32 %s23, %s30
      %s107 = sor.u32 %s105, %s106
      %p108 = scmp.eq.s32.totalorder %s107, 0
      %s110 = sadd.s32 %s109, 1
      %s111 = scalar_select %p108, %s109, %s110
      %p114 = pneg %p108
      %p115 = scmp.eq.s32.totalorder %s15, 1
      %p116 = por %p114, %p115
      %p117 = scmp.ne.s32.totalorder %s109, %s112
      %p118 = scmp.eq.s32.totalorder %s15, 0
      %p119 = por %p117, %p118
      %p120 = scmp.ne.s32.totalorder %s109, %s112
      %p121 = scmp.eq.s32.totalorder %s20, 1
      %p122 = por %p120, %p121
      %p123 = scmp.ne.s32.totalorder %s112, %s113
      %p124 = scmp.eq.s32.totalorder %s20, 0
      %p125 = por %p123, %p124
      %p126 = scmp.ne.s32.totalorder %s112, %s113
      %p127 = scmp.eq.s32.totalorder %s21, 1
      %p128 = por %p126, %p127
      %p130 = scmp.ne.s32.totalorder %s113, %s129
      %p131 = scmp.eq.s32.totalorder %s21, 0
      %p132 = por %p130, %p131
      %p133 = scmp.le.s32.totalorder 1, %s15
      %p134 = scmp.lt.s32.totalorder %s15, 3
      %p135 = pnand %p133, %p134
      %p136 = pneg %p135
      // Predicated region
      $region9: #{tpu_custom_call.1} parent=5 // pred_check
        _
      $region10: #{tpu_custom_call.1} parent=5 // pred_check_branch
        %138 = sbr.rel (%p135) target = $region12
      $region11: #{tpu_custom_call.1} parent=5 // pred_region
        %s139 = ssub.s32 %s15, 1
        // Predicated region
        $region13: #{tpu_custom_call.1} parent=11 // pred_check
          %p140 = pneg %p76
        $region14: #{tpu_custom_call.1} parent=11 // pred_check_branch
          %142 = sbr.rel (%p140) target = $region16
        $region15: #{tpu_custom_call.1} parent=11 // pred_region
          _
        $region16: #{tpu_custom_call.1} parent=11 // pred_fallthru
          _
        // Predicated region
        $region17: #{tpu_custom_call.1} parent=11 // pred_check
          %p143 = pneg %p97
        $region18: #{tpu_custom_call.1} parent=11 // pred_check_branch
          %145 = sbr.rel (%p143) target = $region20
        $region19: #{tpu_custom_call.1} parent=11 // pred_region
          _
        $region20: #{tpu_custom_call.1} parent=11 // pred_fallthru
          _
      $region12: #{tpu_custom_call.1} parent=5 // pred_fallthru
        _
      %p146 = scmp.lt.s32.totalorder %s15, 2
      // Predicated region
      $region21: #{tpu_custom_call.1} parent=5 // pred_check
        %p147 = pneg %p146
      $region22: #{tpu_custom_call.1} parent=5 // pred_check_branch
        %149 = sbr.rel (%p147) target = $region24
      $region23: #{tpu_custom_call.1} parent=5 // pred_region
        // Predicated region
        $region25: #{tpu_custom_call.1} parent=23 // pred_check
          %p150 = pneg %p49
        $region26: #{tpu_custom_call.1} parent=23 // pred_check_branch
          %152 = sbr.rel (%p150) target = $region28
        $region27: #{tpu_custom_call.1} parent=23 // pred_region
          %s153 = sand.u32 %s39, 1
          %s154 = scalar_lea.sflag [#allocation3], %s153
          %s155 = sand.u32 %s39, 1
          %s156 = smul.addr %s155, 128
          %s157 = scalar_lea.vmem [#allocation2], %s156
          %s158 = smul.u32 8, %s23
          %s160 = ssub.s32 2048, 2048
          %161 = vsyncadd %s154, %s160
          %s162 = smul.addr %s22, 16
          %s163 = sadd.s32 %s158, %s162
          %s164 = smul.addr %s163, 128
          %s165 = scalar_lea.hbm %s0, %s164
          %s166 = sshll.u32 %s157, 4
          %s167 = int_to_ptr.vmem [resolvable:$true] %s166
          %172 = dma.hbm_to_vmem [thread:$0]  %s165, 2048, %s167, %s154, 1024, 1024, 64
        $region28: #{tpu_custom_call.1} parent=23 // pred_fallthru
          _
      $region24: #{tpu_custom_call.1} parent=5 // pred_fallthru
        _
      %p173 = scmp.le.s32.totalorder 1, %s15
      %p174 = scmp.lt.s32.totalorder %s15, 3
      %p175 = pnand %p173, %p174
      %p176 = pneg %p175
      // Predicated region
      $region29: #{tpu_custom_call.1} parent=5 // pred_check
        _
      $region30: #{tpu_custom_call.1} parent=5 // pred_check_branch
        %178 = sbr.rel (%p175) target = $region32
      $region31: #{tpu_custom_call.1} parent=5 // pred_region
        %s179 = ssub.s32 %s15, 1
        %s180 = sand.u32 %s42, 1
        %s181 = scalar_lea.sflag [#allocation3], %s180
        %s182 = sand.u32 %s42, 1
        %s183 = smul.addr %s182, 128
        %s184 = scalar_lea.vmem [#allocation2], %s183
        // Predicated region
        $region33: #{tpu_custom_call.1} parent=31 // pred_check
          %p185 = pneg %p55
        $region34: #{tpu_custom_call.1} parent=31 // pred_check_branch
          %187 = sbr.rel (%p185) target = $region36
        $region35: #{tpu_custom_call.1} parent=31 // pred_region
          %188 = dma.done %s181, 2048
        $region36: #{tpu_custom_call.1} parent=31 // pred_fallthru
          _
        %s189 = sand.u32 %s42, 1
        %s190 = scalar_lea.sflag [#allocation3], %s189
        %s191 = sand.u32 %s42, 1
        %s192 = smul.addr %s191, 128
        %s193 = scalar_lea.vmem [#allocation2], %s192
        %p194 = pneg %p55
        %p195 = pneg %p52
        %p196 = pneg %p76
        %p197 = pneg %p73
        %p198 = pneg %p97
        %p199 = pneg %p94
        %p200 = pneg %p125
        %p201 = pneg %p122
        %s202 = sand.u32 %s112, 1
        %s203 = scalar_lea.sflag [#allocation4], %s202
        %s204 = sand.u32 %s112, 1
        %s205 = smul.addr %s204, 512
        %s206 = scalar_lea.vmem [#allocation5], %s205
        %s207 = smul.u32 8, %s25
        %s208 = smul.u32 8, %s25
        %v209 = vld [vmem:[%s184] sm:$0xff]
        %v210 = vld [vmem:[%s184 + $0x8] sm:$0xff]
        %v211 = vld [vmem:[%s184 + $0x10] sm:$0xff]
        %v212 = vld [vmem:[%s184 + $0x18] sm:$0xff]
        %v213 = vld [vmem:[%s184 + $0x20] sm:$0xff]
        %v214 = vld [vmem:[%s184 + $0x28] sm:$0xff]
        %v215 = vld [vmem:[%s184 + $0x30] sm:$0xff]
        %v216 = vld [vmem:[%s184 + $0x38] sm:$0xff]
        %v217 = vld [vmem:[%s184 + $0x40] sm:$0xff]
        %v218 = vld [vmem:[%s184 + $0x48] sm:$0xff]
        %v219 = vld [vmem:[%s184 + $0x50] sm:$0xff]
        %v220 = vld [vmem:[%s184 + $0x58] sm:$0xff]
        %v221 = vld [vmem:[%s184 + $0x60] sm:$0xff]
        %v222 = vld [vmem:[%s184 + $0x68] sm:$0xff]
        %v223 = vld [vmem:[%s184 + $0x70] sm:$0xff]
        %v224 = vld [vmem:[%s184 + $0x78] sm:$0xff]
        %v225 = vld [vmem:[%s1] sm:$0xff]
        %v226 = vld [vmem:[%s1 + $0x8] sm:$0xff]
        %v227 = vld [vmem:[%s1 + $0x10] sm:$0xff]
        %v228 = vld [vmem:[%s1 + $0x18] sm:$0xff]
        %v229 = vld [vmem:[%s1 + $0x20] sm:$0xff]
        %v230 = vld [vmem:[%s1 + $0x28] sm:$0xff]
        %v231 = vld [vmem:[%s1 + $0x30] sm:$0xff]
        %v232 = vld [vmem:[%s1 + $0x38] sm:$0xff]
        %v233 = vld [vmem:[%s2] sm:$0xff]
        %v234 = vld [vmem:[%s2 + $0x8] sm:$0xff]
        %v235 = vld [vmem:[%s2 + $0x10] sm:$0xff]
        %v236 = vld [vmem:[%s2 + $0x18] sm:$0xff]
        %v237 = vld [vmem:[%s2 + $0x20] sm:$0xff]
        %v238 = vld [vmem:[%s2 + $0x28] sm:$0xff]
        %v239 = vld [vmem:[%s2 + $0x30] sm:$0xff]
        %v240 = vld [vmem:[%s2 + $0x38] sm:$0xff]
        %242 = vset.pattern.permute.xlu0 0
        %243 = vperm.xlu0 %242, %v233
        %v244 = vpop.permute.xlu0 %243
        %247 = vset.pattern.permute.xlu0 0
        %248 = vperm.xlu0 %247, %v234
        %v249 = vpop.permute.xlu0 %248
        %252 = vset.pattern.permute.xlu0 0
        %253 = vperm.xlu0 %252, %v235
        %v254 = vpop.permute.xlu0 %253
        %257 = vset.pattern.permute.xlu0 0
        %258 = vperm.xlu0 %257, %v236
        %v259 = vpop.permute.xlu0 %258
        %262 = vset.pattern.permute.xlu0 0
        %263 = vperm.xlu0 %262, %v237
        %v264 = vpop.permute.xlu0 %263
        %267 = vset.pattern.permute.xlu0 0
        %268 = vperm.xlu0 %267, %v238
        %v269 = vpop.permute.xlu0 %268
        %272 = vset.pattern.permute.xlu0 0
        %273 = vperm.xlu0 %272, %v239
        %v274 = vpop.permute.xlu0 %273
        %277 = vset.pattern.permute.xlu0 0
        %278 = vperm.xlu0 %277, %v240
        %v279 = vpop.permute.xlu0 %278
        %vm281 = vcmask 130048
        %v283 = vsel %vm281, %v225, 0
        %v286 = vsel %vm281, %v226, 0
        %v289 = vsel %vm281, %v227, 0
        %v292 = vsel %vm281, %v228, 0
        %v295 = vsel %vm281, %v229, 0
        %v298 = vsel %vm281, %v230, 0
        %v301 = vsel %vm281, %v231, 0
        %v304 = vsel %vm281, %v232, 0
        %306 = vmatprep.subr.mxu0 %v210
        %307 = vmatpush1.msra.mxu0 %v209
        %308 = vmatprep.subr.mxu0 %v218
        %309 = vmatpush1.msra.mxu0 %v217
        %310 = vmatprep.subr.mxu0 0.0
        %311 = vmatpush1.msra.mxu0 0.0
        %312 = vmatprep.subr.mxu0 0.0
        %313 = vmatpush1.msra.mxu0 0.0
        %314 = vmatprep.subr.mxu0 0.0
        %315 = vmatpush1.msra.mxu0 0.0
        %316 = vmatprep.subr.mxu0 0.0
        %317 = vmatpush1.msra.mxu0 0.0
        %318 = vmatprep.subr.mxu0 0.0
        %319 = vmatpush1.msra.mxu0 0.0
        %320 = vmatprep.subr.mxu0 0.0
        %321 = vmatpush1.msra.mxu0 0.0
        %322 = vmatprep.subr.mxu0 0.0
        %323 = vmatpush1.msra.mxu0 0.0
        %324 = vmatprep.subr.mxu0 0.0
        %325 = vmatpush1.msra.mxu0 0.0
        %326 = vmatprep.subr.mxu0 0.0
        %327 = vmatpush1.msra.mxu0 0.0
        %328 = vmatprep.subr.mxu0 0.0
        %329 = vmatpush1.msra.mxu0 0.0
        %330 = vmatprep.subr.mxu0 0.0
        %331 = vmatpush1.msra.mxu0 0.0
        %332 = vmatprep.subr.mxu0 0.0
        %333 = vmatpush1.msra.mxu0 0.0
        %334 = vmatprep.subr.mxu0 0.0
        %335 = vmatpush1.msra.mxu0 0.0
        %336 = vmatprep.subr.mxu0 0.0
        %337 = vmatpush1.msra.mxu0 0.0
        %338 = vmatprep.subr.mxu0 0.0
        %339 = vmatpush1.msra.mxu0 0.0
        %340 = vmatprep.subr.mxu0 0.0
        %341 = vmatpush1.msra.mxu0 0.0
        %342 = vmatprep.subr.mxu0 0.0
        %343 = vmatpush1.msra.mxu0 0.0
        %344 = vmatprep.subr.mxu0 0.0
        %345 = vmatpush1.msra.mxu0 0.0
        %346 = vmatprep.subr.mxu0 0.0
        %347 = vmatpush1.msra.mxu0 0.0
        %348 = vmatprep.subr.mxu0 0.0
        %349 = vmatpush1.msra.mxu0 0.0
        %350 = vmatprep.subr.mxu0 0.0
        %351 = vmatpush1.msra.mxu0 0.0
        %352 = vmatprep.subr.mxu0 0.0
        %353 = vmatpush1.msra.mxu0 0.0
        %354 = vmatprep.subr.mxu0 0.0
        %355 = vmatpush1.msra.mxu0 0.0
        %356 = vmatprep.subr.mxu0 0.0
        %357 = vmatpush1.msra.mxu0 0.0
        %358 = vmatprep.subr.mxu0 0.0
        %359 = vmatpush1.msra.mxu0 0.0
        %360 = vmatprep.subr.mxu0 0.0
        %361 = vmatpush1.msra.mxu0 0.0
        %362 = vmatprep.subr.mxu0 0.0
        %363 = vmatpush1.msra.mxu0 0.0
        %364 = vmatprep.subr.mxu0 0.0
        %365 = vmatpush1.msra.mxu0 0.0
        %366 = vmatprep.subr.mxu0 0.0
        %367 = vmatpush1.msra.mxu0 0.0
        %368 = vmatprep.subr.mxu0 0.0
        %369 = vmatpush1.msra.mxu0 0.0
        %370 = vmatprep.mubr.f32.mxu0 0.0
        %371 = vmatmul.mubr.f32.gmra.mrb[0].mxu0 %v283
        %v372 = vpop.f32.mrb[0].mxu0
        %v373 = vadd.f32 %v244, %v372
        %v374 = vpop.f32.mrb[0].mxu0
        %v375 = vadd.f32 %v244, %v374
        %376 = vmatprep.mubr.f32.mxu0 0.0
        %377 = vmatmul.mubr.f32.gmra.mrb[0].mxu0 %v286
        %v378 = vpop.f32.mrb[0].mxu0
        %v379 = vadd.f32 %v249, %v378
        %v380 = vpop.f32.mrb[0].mxu0
        %v381 = vadd.f32 %v249, %v380
        %382 = vmatprep.mubr.f32.mxu0 0.0
        %383 = vmatmul.mubr.f32.gmra.mrb[0].mxu0 %v289
        %v384 = vpop.f32.mrb[0].mxu0
        %v385 = vadd.f32 %v254, %v384
        %v386 = vpop.f32.mrb[0].mxu0
        %v387 = vadd.f32 %v254, %v386
        %388 = vmatprep.mubr.f32.mxu0 0.0
        %389 = vmatmul.mubr.f32.gmra.mrb[0].mxu0 %v292
        %v390 = vpop.f32.mrb[0].mxu0
        %v391 = vadd.f32 %v259, %v390
        %v392 = vpop.f32.mrb[0].mxu0
        %v393 = vadd.f32 %v259, %v392
        %394 = vmatprep.mubr.f32.mxu0 0.0
        %395 = vmatmul.mubr.f32.gmra.mrb[0].mxu0 %v295
        %v396 = vpop.f32.mrb[0].mxu0
        %v397 = vadd.f32 %v264, %v396
        %v398 = vpop.f32.mrb[0].mxu0
        %v399 = vadd.f32 %v264, %v398
        %400 = vmatprep.mubr.f32.mxu0 0.0
        %401 = vmatmul.mubr.f32.gmra.mrb[0].mxu0 %v298
        %v402 = vpop.f32.mrb[0].mxu0
        %v403 = vadd.f32 %v269, %v402
        %v404 = vpop.f32.mrb[0].mxu0
        %v405 = vadd.f32 %v269, %v404
        %406 = vmatprep.mubr.f32.mxu0 0.0
        %407 = vmatmul.mubr.f32.gmra.mrb[0].mxu0 %v301
        %v408 = vpop.f32.mrb[0].mxu0
        %v409 = vadd.f32 %v274, %v408
        %v410 = vpop.f32.mrb[0].mxu0
        %v411 = vadd.f32 %v274, %v410
        %412 = vmatprep.mubr.f32.mxu0 0.0
        %413 = vmatmul.mubr.f32.gmra.mrb[0].mxu0 %v304
        %v414 = vpop.f32.mrb[0].mxu0
        %v415 = vadd.f32 %v279, %v414
        %v416 = vpop.f32.mrb[0].mxu0
        %v417 = vadd.f32 %v279, %v416
        %418 = vdwg.mxu0
        %419 = vmatprep.subr.mxu0 %v212
        %420 = vmatpush1.msra.mxu0 %v211
        %421 = vmatprep.subr.mxu0 %v220
        %422 = vmatpush1.msra.mxu0 %v219
        %423 = vmatprep.subr.mxu0 0.0
        %424 = vmatpush1.msra.mxu0 0.0
        %425 = vmatprep.subr.mxu0 0.0
        %426 = vmatpush1.msra.mxu0 0.0
        %427 = vmatprep.subr.mxu0 0.0
        %428 = vmatpush1.msra.mxu0 0.0
        %429 = vmatprep.subr.mxu0 0.0
        %430 = vmatpush1.msra.mxu0 0.0
        %431 = vmatprep.subr.mxu0 0.0
        %432 = vmatpush1.msra.mxu0 0.0
        %433 = vmatprep.subr.mxu0 0.0
        %434 = vmatpush1.msra.mxu0 0.0
        %435 = vmatprep.subr.mxu0 0.0
        %436 = vmatpush1.msra.mxu0 0.0
        %437 = vmatprep.subr.mxu0 0.0
        %438 = vmatpush1.msra.mxu0 0.0
        %439 = vmatprep.subr.mxu0 0.0
        %440 = vmatpush1.msra.mxu0 0.0
        %441 = vmatprep.subr.mxu0 0.0
        %442 = vmatpush1.msra.mxu0 0.0
        %443 = vmatprep.subr.mxu0 0.0
        %444 = vmatpush1.msra.mxu0 0.0
        %445 = vmatprep.subr.mxu0 0.0
        %446 = vmatpush1.msra.mxu0 0.0
        %447 = vmatprep.subr.mxu0 0.0
        %448 = vmatpush1.msra.mxu0 0.0
        %449 = vmatprep.subr.mxu0 0.0
        %450 = vmatpush1.msra.mxu0 0.0
        %451 = vmatprep.subr.mxu0 0.0
        %452 = vmatpush1.msra.mxu0 0.0
        %453 = vmatprep.subr.mxu0 0.0
        %454 = vmatpush1.msra.mxu0 0.0
        %455 = vmatprep.subr.mxu0 0.0
        %456 = vmatpush1.msra.mxu0 0.0
        %457 = vmatprep.subr.mxu0 0.0
        %458 = vmatpush1.msra.mxu0 0.0
        %459 = vmatprep.subr.mxu0 0.0
        %460 = vmatpush1.msra.mxu0 0.0
        %461 = vmatprep.subr.mxu0 0.0
        %462 = vmatpush1.msra.mxu0 0.0
        %463 = vmatprep.subr.mxu0 0.0
        %464 = vmatpush1.msra.mxu0 0.0
        %465 = vmatprep.subr.mxu0 0.0
        %466 = vmatpush1.msra.mxu0 0.0
        %467 = vmatprep.subr.mxu0 0.0
        %468 = vmatpush1.msra.mxu0 0.0
        %469 = vmatprep.subr.mxu0 0.0
        %470 = vmatpush1.msra.mxu0 0.0
        %471 = vmatprep.subr.mxu0 0.0
        %472 = vmatpush1.msra.mxu0 0.0
        %473 = vmatprep.subr.mxu0 0.0
        %474 = vmatpush1.msra.mxu0 0.0
        %475 = vmatprep.subr.mxu0 0.0
        %476 = vmatpush1.msra.mxu0 0.0
        %477 = vmatprep.subr.mxu0 0.0
        %478 = vmatpush1.msra.mxu0 0.0
        %479 = vmatprep.subr.mxu0 0.0
        %480 = vmatpush1.msra.mxu0 0.0
        %481 = vmatprep.subr.mxu0 0.0
        %482 = vmatpush1.msra.mxu0 0.0
        %483 = vmatprep.mubr.f32.mxu0 0.0
        %484 = vmatmul.mubr.f32.gmra.mrb[0].mxu0 %v283
        %v485 = vpop.f32.mrb[0].mxu0
        %v486 = vadd.f32 %v244, %v485
        %v487 = vpop.f32.mrb[0].mxu0
        %v488 = vadd.f32 %v244, %v487
        %489 = vmatprep.mubr.f32.mxu0 0.0
        %490 = vmatmul.mubr.f32.gmra.mrb[0].mxu0 %v286
        %v491 = vpop.f32.mrb[0].mxu0
        %v492 = vadd.f32 %v249, %v491
        %v493 = vpop.f32.mrb[0].mxu0
        %v494 = vadd.f32 %v249, %v493
        %495 = vmatprep.mubr.f32.mxu0 0.0
        %496 = vmatmul.mubr.f32.gmra.mrb[0].mxu0 %v289
        %v497 = vpop.f32.mrb[0].mxu0
        %v498 = vadd.f32 %v254, %v497
        %v499 = vpop.f32.mrb[0].mxu0
        %v500 = vadd.f32 %v254, %v499
        %501 = vmatprep.mubr.f32.mxu0 0.0
        %502 = vmatmul.mubr.f32.gmra.mrb[0].mxu0 %v292
        %v503 = vpop.f32.mrb[0].mxu0
        %v504 = vadd.f32 %v259, %v503
        %v505 = vpop.f32.mrb[0].mxu0
        %v506 = vadd.f32 %v259, %v505
        %507 = vmatprep.mubr.f32.mxu0 0.0
        %508 = vmatmul.mubr.f32.gmra.mrb[0].mxu0 %v295
        %v509 = vpop.f32.mrb[0].mxu0
        %v510 = vadd.f32 %v264, %v509
        %v511 = vpop.f32.mrb[0].mxu0
        %v512 = vadd.f32 %v264, %v511
        %513 = vmatprep.mubr.f32.mxu0 0.0
        %514 = vmatmul.mubr.f32.gmra.mrb[0].mxu0 %v298
        %v515 = vpop.f32.mrb[0].mxu0
        %v516 = vadd.f32 %v269, %v515
        %v517 = vpop.f32.mrb[0].mxu0
        %v518 = vadd.f32 %v269, %v517
        %519 = vmatprep.mubr.f32.mxu0 0.0
        %520 = vmatmul.mubr.f32.gmra.mrb[0].mxu0 %v301
        %v521 = vpop.f32.mrb[0].mxu0
        %v522 = vadd.f32 %v274, %v521
        %v523 = vpop.f32.mrb[0].mxu0
        %v524 = vadd.f32 %v274, %v523
        %525 = vmatprep.mubr.f32.mxu0 0.0
        %526 = vmatmul.mubr.f32.gmra.mrb[0].mxu0 %v304
        %v527 = vpop.f32.mrb[0].mxu0
        %v528 = vadd.f32 %v279, %v527
        %v529 = vpop.f32.mrb[0].mxu0
        %v530 = vadd.f32 %v279, %v529
        %531 = vdwg.mxu0
        %532 = vmatprep.subr.mxu0 %v214
        %533 = vmatpush1.msra.mxu0 %v213
        %534 = vmatprep.subr.mxu0 %v222
        %535 = vmatpush1.msra.mxu0 %v221
        %536 = vmatprep.subr.mxu0 0.0
        %537 = vmatpush1.msra.mxu0 0.0
        %538 = vmatprep.subr.mxu0 0.0
        %539 = vmatpush1.msra.mxu0 0.0
        %540 = vmatprep.subr.mxu0 0.0
        %541 = vmatpush1.msra.mxu0 0.0
        %542 = vmatprep.subr.mxu0 0.0
        %543 = vmatpush1.msra.mxu0 0.0
        %544 = vmatprep.subr.mxu0 0.0
        %545 = vmatpush1.msra.mxu0 0.0
        %546 = vmatprep.subr.mxu0 0.0
        %547 = vmatpush1.msra.mxu0 0.0
        %548 = vmatprep.subr.mxu0 0.0
        %549 = vmatpush1.msra.mxu0 0.0
        %550 = vmatprep.subr.mxu0 0.0
        %551 = vmatpush1.msra.mxu0 0.0
        %552 = vmatprep.subr.mxu0 0.0
        %553 = vmatpush1.msra.mxu0 0.0
        %554 = vmatprep.subr.mxu0 0.0
        %555 = vmatpush1.msra.mxu0 0.0
        %556 = vmatprep.subr.mxu0 0.0
        %557 = vmatpush1.msra.mxu0 0.0
        %558 = vmatprep.subr.mxu0 0.0
        %559 = vmatpush1.msra.mxu0 0.0
        %560 = vmatprep.subr.mxu0 0.0
        %561 = vmatpush1.msra.mxu0 0.0
        %562 = vmatprep.subr.mxu0 0.0
        %563 = vmatpush1.msra.mxu0 0.0
        %564 = vmatprep.subr.mxu0 0.0
        %565 = vmatpush1.msra.mxu0 0.0
        %566 = vmatprep.subr.mxu0 0.0
        %567 = vmatpush1.msra.mxu0 0.0
        %568 = vmatprep.subr.mxu0 0.0
        %569 = vmatpush1.msra.mxu0 0.0
        %570 = vmatprep.subr.mxu0 0.0
        %571 = vmatpush1.msra.mxu0 0.0
        %572 = vmatprep.subr.mxu0 0.0
        %573 = vmatpush1.msra.mxu0 0.0
        %574 = vmatprep.subr.mxu0 0.0
        %575 = vmatpush1.msra.mxu0 0.0
        %576 = vmatprep.subr.mxu0 0.0
        %577 = vmatpush1.msra.mxu0 0.0
        %578 = vmatprep.subr.mxu0 0.0
        %579 = vmatpush1.msra.mxu0 0.0
        %580 = vmatprep.subr.mxu0 0.0
        %581 = vmatpush1.msra.mxu0 0.0
        %582 = vmatprep.subr.mxu0 0.0
        %583 = vmatpush1.msra.mxu0 0.0
        %584 = vmatprep.subr.mxu0 0.0
        %585 = vmatpush1.msra.mxu0 0.0
        %586 = vmatprep.subr.mxu0 0.0
        %587 = vmatpush1.msra.mxu0 0.0
        %588 = vmatprep.subr.mxu0 0.0
        %589 = vmatpush1.msra.mxu0 0.0
        %590 = vmatprep.subr.mxu0 0.0
        %591 = vmatpush1.msra.mxu0 0.0
        %592 = vmatprep.subr.mxu0 0.0
        %593 = vmatpush1.msra.mxu0 0.0
        %594 = vmatprep.subr.mxu0 0.0
        %595 = vmatpush1.msra.mxu0 0.0
        %596 = vmatprep.mubr.f32.mxu0 0.0
        %597 = vmatmul.mubr.f32.gmra.mrb[0].mxu0 %v283
        %v598 = vpop.f32.mrb[0].mxu0
        %v599 = vadd.f32 %v244, %v598
        %v600 = vpop.f32.mrb[0].mxu0
        %v601 = vadd.f32 %v244, %v600
        %602 = vmatprep.mubr.f32.mxu0 0.0
        %603 = vmatmul.mubr.f32.gmra.mrb[0].mxu0 %v286
        %v604 = vpop.f32.mrb[0].mxu0
        %v605 = vadd.f32 %v249, %v604
        %v606 = vpop.f32.mrb[0].mxu0
        %v607 = vadd.f32 %v249, %v606
        %608 = vmatprep.mubr.f32.mxu0 0.0
        %609 = vmatmul.mubr.f32.gmra.mrb[0].mxu0 %v289
        %v610 = vpop.f32.mrb[0].mxu0
        %v611 = vadd.f32 %v254, %v610
        %v612 = vpop.f32.mrb[0].mxu0
        %v613 = vadd.f32 %v254, %v612
        %614 = vmatprep.mubr.f32.mxu0 0.0
        %615 = vmatmul.mubr.f32.gmra.mrb[0].mxu0 %v292
        %v616 = vpop.f32.mrb[0].mxu0
        %v617 = vadd.f32 %v259, %v616
        %v618 = vpop.f32.mrb[0].mxu0
        %v619 = vadd.f32 %v259, %v618
        %620 = vmatprep.mubr.f32.mxu0 0.0
        %621 = vmatmul.mubr.f32.gmra.mrb[0].mxu0 %v295
        %v622 = vpop.f32.mrb[0].mxu0
        %v623 = vadd.f32 %v264, %v622
        %v624 = vpop.f32.mrb[0].mxu0
        %v625 = vadd.f32 %v264, %v624
        %626 = vmatprep.mubr.f32.mxu0 0.0
        %627 = vmatmul.mubr.f32.gmra.mrb[0].mxu0 %v298
        %v628 = vpop.f32.mrb[0].mxu0
        %v629 = vadd.f32 %v269, %v628
        %v630 = vpop.f32.mrb[0].mxu0
        %v631 = vadd.f32 %v269, %v630
        %632 = vmatprep.mubr.f32.mxu0 0.0
        %633 = vmatmul.mubr.f32.gmra.mrb[0].mxu0 %v301
        %v634 = vpop.f32.mrb[0].mxu0
        %v635 = vadd.f32 %v274, %v634
        %v636 = vpop.f32.mrb[0].mxu0
        %v637 = vadd.f32 %v274, %v636
        %638 = vmatprep.mubr.f32.mxu0 0.0
        %639 = vmatmul.mubr.f32.gmra.mrb[0].mxu0 %v304
        %v640 = vpop.f32.mrb[0].mxu0
        %v641 = vadd.f32 %v279, %v640
        %v642 = vpop.f32.mrb[0].mxu0
        %v643 = vadd.f32 %v279, %v642
        %644 = vdwg.mxu0
        %645 = vmatprep.subr.mxu0 %v216
        %646 = vmatpush1.msra.mxu0 %v215
        %647 = vmatprep.subr.mxu0 %v224
        %648 = vmatpush1.msra.mxu0 %v223
        %649 = vmatprep.subr.mxu0 0.0
        %650 = vmatpush1.msra.mxu0 0.0
        %651 = vmatprep.subr.mxu0 0.0
        %652 = vmatpush1.msra.mxu0 0.0
        %653 = vmatprep.subr.mxu0 0.0
        %654 = vmatpush1.msra.mxu0 0.0
        %655 = vmatprep.subr.mxu0 0.0
        %656 = vmatpush1.msra.mxu0 0.0
        %657 = vmatprep.subr.mxu0 0.0
        %658 = vmatpush1.msra.mxu0 0.0
        %659 = vmatprep.subr.mxu0 0.0
        %660 = vmatpush1.msra.mxu0 0.0
        %661 = vmatprep.subr.mxu0 0.0
        %662 = vmatpush1.msra.mxu0 0.0
        %663 = vmatprep.subr.mxu0 0.0
        %664 = vmatpush1.msra.mxu0 0.0
        %665 = vmatprep.subr.mxu0 0.0
        %666 = vmatpush1.msra.mxu0 0.0
        %667 = vmatprep.subr.mxu0 0.0
        %668 = vmatpush1.msra.mxu0 0.0
        %669 = vmatprep.subr.mxu0 0.0
        %670 = vmatpush1.msra.mxu0 0.0
        %671 = vmatprep.subr.mxu0 0.0
        %672 = vmatpush1.msra.mxu0 0.0
        %673 = vmatprep.subr.mxu0 0.0
        %674 = vmatpush1.msra.mxu0 0.0
        %675 = vmatprep.subr.mxu0 0.0
        %676 = vmatpush1.msra.mxu0 0.0
        %677 = vmatprep.subr.mxu0 0.0
        %678 = vmatpush1.msra.mxu0 0.0
        %679 = vmatprep.subr.mxu0 0.0
        %680 = vmatpush1.msra.mxu0 0.0
        %681 = vmatprep.subr.mxu0 0.0
        %682 = vmatpush1.msra.mxu0 0.0
        %683 = vmatprep.subr.mxu0 0.0
        %684 = vmatpush1.msra.mxu0 0.0
        %685 = vmatprep.subr.mxu0 0.0
        %686 = vmatpush1.msra.mxu0 0.0
        %687 = vmatprep.subr.mxu0 0.0
        %688 = vmatpush1.msra.mxu0 0.0
        %689 = vmatprep.subr.mxu0 0.0
        %690 = vmatpush1.msra.mxu0 0.0
        %691 = vmatprep.subr.mxu0 0.0
        %692 = vmatpush1.msra.mxu0 0.0
        %693 = vmatprep.subr.mxu0 0.0
        %694 = vmatpush1.msra.mxu0 0.0
        %695 = vmatprep.subr.mxu0 0.0
        %696 = vmatpush1.msra.mxu0 0.0
        %697 = vmatprep.subr.mxu0 0.0
        %698 = vmatpush1.msra.mxu0 0.0
        %699 = vmatprep.subr.mxu0 0.0
        %700 = vmatpush1.msra.mxu0 0.0
        %701 = vmatprep.subr.mxu0 0.0
        %702 = vmatpush1.msra.mxu0 0.0
        %703 = vmatprep.subr.mxu0 0.0
        %704 = vmatpush1.msra.mxu0 0.0
        %705 = vmatprep.subr.mxu0 0.0
        %706 = vmatpush1.msra.mxu0 0.0
        %707 = vmatprep.subr.mxu0 0.0
        %708 = vmatpush1.msra.mxu0 0.0
        %709 = vmatprep.mubr.f32.mxu0 0.0
        %710 = vmatmul.mubr.f32.gmra.mrb[0].mxu0 %v283
        %v711 = vpop.f32.mrb[0].mxu0
        %v712 = vadd.f32 %v244, %v711
        %v713 = vpop.f32.mrb[0].mxu0
        %v714 = vadd.f32 %v244, %v713
        %715 = vmatprep.mubr.f32.mxu0 0.0
        %716 = vmatmul.mubr.f32.gmra.mrb[0].mxu0 %v286
        %v717 = vpop.f32.mrb[0].mxu0
        %v718 = vadd.f32 %v249, %v717
        %v719 = vpop.f32.mrb[0].mxu0
        %v720 = vadd.f32 %v249, %v719
        %721 = vmatprep.mubr.f32.mxu0 0.0
        %722 = vmatmul.mubr.f32.gmra.mrb[0].mxu0 %v289
        %v723 = vpop.f32.mrb[0].mxu0
        %v724 = vadd.f32 %v254, %v723
        %v725 = vpop.f32.mrb[0].mxu0
        %v726 = vadd.f32 %v254, %v725
        %727 = vmatprep.mubr.f32.mxu0 0.0
        %728 = vmatmul.mubr.f32.gmra.mrb[0].mxu0 %v292
        %v729 = vpop.f32.mrb[0].mxu0
        %v730 = vadd.f32 %v259, %v729
        %v731 = vpop.f32.mrb[0].mxu0
        %v732 = vadd.f32 %v259, %v731
        %733 = vmatprep.mubr.f32.mxu0 0.0
        %734 = vmatmul.mubr.f32.gmra.mrb[0].mxu0 %v295
        %v735 = vpop.f32.mrb[0].mxu0
        %v736 = vadd.f32 %v264, %v735
        %v737 = vpop.f32.mrb[0].mxu0
        %v738 = vadd.f32 %v264, %v737
        %739 = vmatprep.mubr.f32.mxu0 0.0
        %740 = vmatmul.mubr.f32.gmra.mrb[0].mxu0 %v298
        %v741 = vpop.f32.mrb[0].mxu0
        %v742 = vadd.f32 %v269, %v741
        %v743 = vpop.f32.mrb[0].mxu0
        %v744 = vadd.f32 %v269, %v743
        %745 = vmatprep.mubr.f32.mxu0 0.0
        %746 = vmatmul.mubr.f32.gmra.mrb[0].mxu0 %v301
        %v747 = vpop.f32.mrb[0].mxu0
        %v748 = vadd.f32 %v274, %v747
        %v749 = vpop.f32.mrb[0].mxu0
        %v750 = vadd.f32 %v274, %v749
        %751 = vmatprep.mubr.f32.mxu0 0.0
        %752 = vmatmul.mubr.f32.gmra.mrb[0].mxu0 %v304
        %v753 = vpop.f32.mrb[0].mxu0
        %v754 = vadd.f32 %v279, %v753
        %v755 = vpop.f32.mrb[0].mxu0
        %v756 = vadd.f32 %v279, %v755
        %757 = vdwg.mxu0
        %v758 = vmul.f32 %v373, 0.01
        %v759 = vmul.f32 %v375, 0.01
        %v760 = vmul.f32 %v486, 0.01
        %v761 = vmul.f32 %v488, 0.01
        %v762 = vmul.f32 %v599, 0.01
        %v763 = vmul.f32 %v601, 0.01
        %v764 = vmul.f32 %v712, 0.01
        %v765 = vmul.f32 %v714, 0.01
        %v766 = vmul.f32 %v379, 0.01
        %v767 = vmul.f32 %v381, 0.01
        %v768 = vmul.f32 %v492, 0.01
        %v769 = vmul.f32 %v494, 0.01
        %v770 = vmul.f32 %v605, 0.01
        %v771 = vmul.f32 %v607, 0.01
        %v772 = vmul.f32 %v718, 0.01
        %v773 = vmul.f32 %v720, 0.01
        %v774 = vmul.f32 %v385, 0.01
        %v775 = vmul.f32 %v387, 0.01
        %v776 = vmul.f32 %v498, 0.01
        %v777 = vmul.f32 %v500, 0.01
        %v778 = vmul.f32 %v611, 0.01
        %v779 = vmul.f32 %v613, 0.01
        %v780 = vmul.f32 %v724, 0.01
        %v781 = vmul.f32 %v726, 0.01
        %v782 = vmul.f32 %v391, 0.01
        %v783 = vmul.f32 %v393, 0.01
        %v784 = vmul.f32 %v504, 0.01
        %v785 = vmul.f32 %v506, 0.01
        %v786 = vmul.f32 %v617, 0.01
        %v787 = vmul.f32 %v619, 0.01
        %v788 = vmul.f32 %v730, 0.01
        %v789 = vmul.f32 %v732, 0.01
        %v790 = vmul.f32 %v397, 0.01
        %v791 = vmul.f32 %v399, 0.01
        %v792 = vmul.f32 %v510, 0.01
        %v793 = vmul.f32 %v512, 0.01
        %v794 = vmul.f32 %v623, 0.01
        %v795 = vmul.f32 %v625, 0.01
        %v796 = vmul.f32 %v736, 0.01
        %v797 = vmul.f32 %v738, 0.01
        %v798 = vmul.f32 %v403, 0.01
        %v799 = vmul.f32 %v405, 0.01
        %v800 = vmul.f32 %v516, 0.01
        %v801 = vmul.f32 %v518, 0.01
        %v802 = vmul.f32 %v629, 0.01
        %v803 = vmul.f32 %v631, 0.01
        %v804 = vmul.f32 %v742, 0.01
        %v805 = vmul.f32 %v744, 0.01
        %v806 = vmul.f32 %v409, 0.01
        %v807 = vmul.f32 %v411, 0.01
        %v808 = vmul.f32 %v522, 0.01
        %v809 = vmul.f32 %v524, 0.01
        %v810 = vmul.f32 %v635, 0.01
        %v811 = vmul.f32 %v637, 0.01
        %v812 = vmul.f32 %v748, 0.01
        %v813 = vmul.f32 %v750, 0.01
        %v814 = vmul.f32 %v415, 0.01
        %v815 = vmul.f32 %v417, 0.01
        %v816 = vmul.f32 %v528, 0.01
        %v817 = vmul.f32 %v530, 0.01
        %v818 = vmul.f32 %v641, 0.01
        %v819 = vmul.f32 %v643, 0.01
        %v820 = vmul.f32 %v754, 0.01
        %v821 = vmul.f32 %v756, 0.01
        %v822 = vmax.f32 %v373, %v758
        %v823 = vmax.f32 %v375, %v759
        %v824 = vmax.f32 %v486, %v760
        %v825 = vmax.f32 %v488, %v761
        %v826 = vmax.f32 %v599, %v762
        %v827 = vmax.f32 %v601, %v763
        %v828 = vmax.f32 %v712, %v764
        %v829 = vmax.f32 %v714, %v765
        %v830 = vmax.f32 %v379, %v766
        %v831 = vmax.f32 %v381, %v767
        %v832 = vmax.f32 %v492, %v768
        %v833 = vmax.f32 %v494, %v769
        %v834 = vmax.f32 %v605, %v770
        %v835 = vmax.f32 %v607, %v771
        %v836 = vmax.f32 %v718, %v772
        %v837 = vmax.f32 %v720, %v773
        %v838 = vmax.f32 %v385, %v774
        %v839 = vmax.f32 %v387, %v775
        %v840 = vmax.f32 %v498, %v776
        %v841 = vmax.f32 %v500, %v777
        %v842 = vmax.f32 %v611, %v778
        %v843 = vmax.f32 %v613, %v779
        %v844 = vmax.f32 %v724, %v780
        %v845 = vmax.f32 %v726, %v781
        %v846 = vmax.f32 %v391, %v782
        %v847 = vmax.f32 %v393, %v783
        %v848 = vmax.f32 %v504, %v784
        %v849 = vmax.f32 %v506, %v785
        %v850 = vmax.f32 %v617, %v786
        %v851 = vmax.f32 %v619, %v787
        %v852 = vmax.f32 %v730, %v788
        %v853 = vmax.f32 %v732, %v789
        %v854 = vmax.f32 %v397, %v790
        %v855 = vmax.f32 %v399, %v791
        %v856 = vmax.f32 %v510, %v792
        %v857 = vmax.f32 %v512, %v793
        %v858 = vmax.f32 %v623, %v794
        %v859 = vmax.f32 %v625, %v795
        %v860 = vmax.f32 %v736, %v796
        %v861 = vmax.f32 %v738, %v797
        %v862 = vmax.f32 %v403, %v798
        %v863 = vmax.f32 %v405, %v799
        %v864 = vmax.f32 %v516, %v800
        %v865 = vmax.f32 %v518, %v801
        %v866 = vmax.f32 %v629, %v802
        %v867 = vmax.f32 %v631, %v803
        %v868 = vmax.f32 %v742, %v804
        %v869 = vmax.f32 %v744, %v805
        %v870 = vmax.f32 %v409, %v806
        %v871 = vmax.f32 %v411, %v807
        %v872 = vmax.f32 %v522, %v808
        %v873 = vmax.f32 %v524, %v809
        %v874 = vmax.f32 %v635, %v810
        %v875 = vmax.f32 %v637, %v811
        %v876 = vmax.f32 %v748, %v812
        %v877 = vmax.f32 %v750, %v813
        %v878 = vmax.f32 %v415, %v814
        %v879 = vmax.f32 %v417, %v815
        %v880 = vmax.f32 %v528, %v816
        %v881 = vmax.f32 %v530, %v817
        %v882 = vmax.f32 %v641, %v818
        %v883 = vmax.f32 %v643, %v819
        %v884 = vmax.f32 %v754, %v820
        %v885 = vmax.f32 %v756, %v821
        %886 = vst [vmem:[%s206] sm:$0xff] %v822
        %887 = vst [vmem:[%s206 + $0x8] sm:$0xff] %v823
        %888 = vst [vmem:[%s206 + $0x10] sm:$0xff] %v824
        %889 = vst [vmem:[%s206 + $0x18] sm:$0xff] %v825
        %890 = vst [vmem:[%s206 + $0x20] sm:$0xff] %v826
        %891 = vst [vmem:[%s206 + $0x28] sm:$0xff] %v827
        %892 = vst [vmem:[%s206 + $0x30] sm:$0xff] %v828
        %893 = vst [vmem:[%s206 + $0x38] sm:$0xff] %v829
        %894 = vst [vmem:[%s206 + $0x40] sm:$0xff] %v830
        %895 = vst [vmem:[%s206 + $0x48] sm:$0xff] %v831
        %896 = vst [vmem:[%s206 + $0x50] sm:$0xff] %v832
        %897 = vst [vmem:[%s206 + $0x58] sm:$0xff] %v833
        %898 = vst [vmem:[%s206 + $0x60] sm:$0xff] %v834
        %899 = vst [vmem:[%s206 + $0x68] sm:$0xff] %v835
        %900 = vst [vmem:[%s206 + $0x70] sm:$0xff] %v836
        %901 = vst [vmem:[%s206 + $0x78] sm:$0xff] %v837
        %902 = vst [vmem:[%s206 + $0x80] sm:$0xff] %v838
        %903 = vst [vmem:[%s206 + $0x88] sm:$0xff] %v839
        %904 = vst [vmem:[%s206 + $0x90] sm:$0xff] %v840
        %905 = vst [vmem:[%s206 + $0x98] sm:$0xff] %v841
        %906 = vst [vmem:[%s206 + $0xa0] sm:$0xff] %v842
        %907 = vst [vmem:[%s206 + $0xa8] sm:$0xff] %v843
        %908 = vst [vmem:[%s206 + $0xb0] sm:$0xff] %v844
        %909 = vst [vmem:[%s206 + $0xb8] sm:$0xff] %v845
        %910 = vst [vmem:[%s206 + $0xc0] sm:$0xff] %v846
        %911 = vst [vmem:[%s206 + $0xc8] sm:$0xff] %v847
        %912 = vst [vmem:[%s206 + $0xd0] sm:$0xff] %v848
        %913 = vst [vmem:[%s206 + $0xd8] sm:$0xff] %v849
        %914 = vst [vmem:[%s206 + $0xe0] sm:$0xff] %v850
        %915 = vst [vmem:[%s206 + $0xe8] sm:$0xff] %v851
        %916 = vst [vmem:[%s206 + $0xf0] sm:$0xff] %v852
        %917 = vst [vmem:[%s206 + $0xf8] sm:$0xff] %v853
        %918 = vst [vmem:[%s206 + $0x100] sm:$0xff] %v854
        %919 = vst [vmem:[%s206 + $0x108] sm:$0xff] %v855
        %920 = vst [vmem:[%s206 + $0x110] sm:$0xff] %v856
        %921 = vst [vmem:[%s206 + $0x118] sm:$0xff] %v857
        %922 = vst [vmem:[%s206 + $0x120] sm:$0xff] %v858
        %923 = vst [vmem:[%s206 + $0x128] sm:$0xff] %v859
        %924 = vst [vmem:[%s206 + $0x130] sm:$0xff] %v860
        %925 = vst [vmem:[%s206 + $0x138] sm:$0xff] %v861
        %926 = vst [vmem:[%s206 + $0x140] sm:$0xff] %v862
        %927 = vst [vmem:[%s206 + $0x148] sm:$0xff] %v863
        %928 = vst [vmem:[%s206 + $0x150] sm:$0xff] %v864
        %929 = vst [vmem:[%s206 + $0x158] sm:$0xff] %v865
        %930 = vst [vmem:[%s206 + $0x160] sm:$0xff] %v866
        %931 = vst [vmem:[%s206 + $0x168] sm:$0xff] %v867
        %932 = vst [vmem:[%s206 + $0x170] sm:$0xff] %v868
        %933 = vst [vmem:[%s206 + $0x178] sm:$0xff] %v869
        %934 = vst [vmem:[%s206 + $0x180] sm:$0xff] %v870
        %935 = vst [vmem:[%s206 + $0x188] sm:$0xff] %v871
        %936 = vst [vmem:[%s206 + $0x190] sm:$0xff] %v872
        %937 = vst [vmem:[%s206 + $0x198] sm:$0xff] %v873
        %938 = vst [vmem:[%s206 + $0x1a0] sm:$0xff] %v874
        %939 = vst [vmem:[%s206 + $0x1a8] sm:$0xff] %v875
        %940 = vst [vmem:[%s206 + $0x1b0] sm:$0xff] %v876
        %941 = vst [vmem:[%s206 + $0x1b8] sm:$0xff] %v877
        %942 = vst [vmem:[%s206 + $0x1c0] sm:$0xff] %v878
        %943 = vst [vmem:[%s206 + $0x1c8] sm:$0xff] %v879
        %944 = vst [vmem:[%s206 + $0x1d0] sm:$0xff] %v880
        %945 = vst [vmem:[%s206 + $0x1d8] sm:$0xff] %v881
        %946 = vst [vmem:[%s206 + $0x1e0] sm:$0xff] %v882
        %947 = vst [vmem:[%s206 + $0x1e8] sm:$0xff] %v883
        %948 = vst [vmem:[%s206 + $0x1f0] sm:$0xff] %v884
        %949 = vst [vmem:[%s206 + $0x1f8] sm:$0xff] %v885
        %s950 = sand.u32 %s112, 1
        %s951 = scalar_lea.sflag [#allocation4], %s950
        %s952 = sand.u32 %s112, 1
        %s953 = smul.addr %s952, 512
        %s954 = scalar_lea.vmem [#allocation5], %s953
        // Predicated region
        $region37: #{tpu_custom_call.1} parent=31 // pred_check
          %p955 = pneg %p122
        $region38: #{tpu_custom_call.1} parent=31 // pred_check_branch
          %957 = sbr.rel (%p955) target = $region40
        $region39: #{tpu_custom_call.1} parent=31 // pred_region
          %s958 = smul.u32 8, %s25
          %s960 = ssub.s32 8192, 8192
          %961 = vsyncadd %s951, %s960
          %s962 = smul.addr %s24, 64
          %s963 = sadd.s32 %s958, %s962
          %s964 = smul.addr %s963, 128
          %s965 = scalar_lea.hbm %s3, %s964
          %s966 = sshll.u32 %s954, 4
          %s967 = int_to_ptr.vmem [resolvable:$true] %s966
          %972 = dma.vmem_to_hbm [thread:$0]  %s967, 8192, %s965, %s951, 1024, 1024, 64
        $region40: #{tpu_custom_call.1} parent=31 // pred_fallthru
          _
      $region32: #{tpu_custom_call.1} parent=5 // pred_fallthru
        _
      %p973 = scmp.le.s32.totalorder 2, %s15
      // Predicated region
      $region41: #{tpu_custom_call.1} parent=5 // pred_check
        %p974 = pneg %p973
      $region42: #{tpu_custom_call.1} parent=5 // pred_check_branch
        %976 = sbr.rel (%p974) target = $region44
      $region43: #{tpu_custom_call.1} parent=5 // pred_region
        %s977 = ssub.s32 %s15, 2
        // Predicated region
        $region45: #{tpu_custom_call.1} parent=43 // pred_check
          %p978 = pneg %p128
        $region46: #{tpu_custom_call.1} parent=43 // pred_check_branch
          %980 = sbr.rel (%p978) target = $region48
        $region47: #{tpu_custom_call.1} parent=43 // pred_region
          %s981 = sand.u32 %s113, 1
          %s982 = scalar_lea.sflag [#allocation4], %s981
          %s983 = sand.u32 %s113, 1
          %s984 = smul.addr %s983, 512
          %s985 = scalar_lea.vmem [#allocation5], %s984
          %986 = dma.done %s982, 8192
        $region48: #{tpu_custom_call.1} parent=43 // pred_fallthru
          _
      $region44: #{tpu_custom_call.1} parent=5 // pred_fallthru
        _
    $region6: #{tpu_custom_call.1} parent=1 // loop_footer
      %s19 = sadd.s32 1, %s15
    $region7: #{tpu_custom_call.1} parent=1 // loop_footer_branch
      %14 = sbr.rel target = $region3
    $region8: #{tpu_custom_call.1} parent=1 // loop_exit
      _
    %987 = vsyncpa [#allocation3], 1
    %s988 = scalar_lea.sflag [#allocation3], 1
    %989 = vsyncpa %s988, 1
    %990 = vsyncpa [#allocation4], 1
    %s991 = scalar_lea.sflag [#allocation4], 1
    %992 = vsyncpa %s991, 1

</llo_original>
